<compile_context>
chip_gen: v6e
topology: v6e:2x2x1
jax: 0.10.0
libtpu: 0.0.40
codegen_flags: <defaults>
</compile_context>

<pallas_src>
import functools

import numpy as np
import jax
import jax.numpy as jnp
from jax.experimental import pallas as pl
from jax.experimental.pallas import tpu as pltpu

# Lane widths tried in preference order (all multiples of 128; 512 is the
# sweet spot for lane-dense stores).
_LANE_CANDIDATES = (512, 1024, 896, 768, 640, 384, 256, 128)
_MAX_BLOCK_ROWS = 2048   # ~1-5 MiB of traffic per step at lane=512 (u8 -> f32)
_TARGET_STEPS = 8        # minimum-ish grid length: pipelining + v7x megacore


def _cdiv(a: int, b: int) -> int:
    return -(-a // b)


def _round_up(a: int, b: int) -> int:
    return _cdiv(a, b) * b


def _sublane_align(dtype) -> int:
    # Packed sublane tile: 32 rows for 1-byte dtypes, 16 for 2-byte, 8 for 4-byte.
    itemsize = jnp.dtype(dtype).itemsize
    return 8 * max(1, 4 // max(1, itemsize))


def _to_dtype_kernel(x_ref, o_ref, *, scale: bool):
    v = x_ref[...].astype(jnp.float32)
    if scale:
        v = v / jnp.float32(255.0)
    o_ref[...] = v.astype(o_ref.dtype)


def to_dtype(x: jax.Array, dtype=jnp.float32, scale: bool = True) -> jax.Array:
    """Mirror of ToDType on a single tensor: cast to `dtype`, optionally /255."""
    out_dtype = jnp.dtype(dtype)
    if scale and not jnp.issubdtype(out_dtype, jnp.floating):
        # torch's `clips /= 255.0` on an integer tensor errors; mirror that.
        raise ValueError("ToDType with scale=True requires a floating dtype.")

    n = int(x.size)
    if n == 0:
        return jnp.zeros(x.shape, out_dtype)

    # Pick a lane width (multiple of 128) that exactly divides the element
    # count, so the flat view is a free reshape with no padding at all.
    lane = next((c for c in _LANE_CANDIDATES if n % c == 0), None)
    if lane is None:
        # TODO(synk): element counts with no multiple-of-128 divisor (never the
        # case for real uint8 video clips) fall back to one fused XLA op -- a
        # single HBM read+write pass, same traffic as the kernel path.
        v = x.astype(jnp.float32)
        if scale:
            v = v / jnp.float32(255.0)
        return v.astype(out_dtype)

    rows = n // lane
    x2d = x.reshape(rows, lane)  # contiguous reshape: no data movement

    # --- Block sizing -------------------------------------------------------
    align = max(_sublane_align(x.dtype), _sublane_align(out_dtype), 8)

    try:
        vmem_cap = int(pltpu.get_tpu_info().vmem_capacity_bytes)
    except Exception:
        vmem_cap = 64 << 20  # conservative (v7x per-TC) fallback
    budget = vmem_cap // 8   # bytes allowed for the double-buffered in+out blocks
    per_row_bytes = 2 * lane * (x.dtype.itemsize + out_dtype.itemsize)
    max_rows_vmem = max(align, (budget // per_row_bytes) // align * align)
    max_block_rows = max(align, min(max_rows_vmem, _MAX_BLOCK_ROWS))

    # Aim for >= _TARGET_STEPS grid steps, rounded to the packed-row tile.
    block_rows = _round_up(max(1, _cdiv(rows, _TARGET_STEPS)), align)
    block_rows = min(block_rows, max_block_rows)
    if block_rows >= rows:
        block_rows = rows  # single full block (== full dim, always legal)
    grid = _cdiv(rows, block_rows)

    # Nudge toward an even grid length so v7x's two TensorCores split evenly.
    if grid > 2 and grid % 2 == 1:
        alt = _round_up(max(1, _cdiv(rows, grid + 1)), align)
        if alt >= align and alt < rows and _cdiv(rows, alt) % 2 == 0:
            block_rows = alt
            grid = _cdiv(rows, alt)

    kernel = functools.partial(_to_dtype_kernel, scale=scale)

    out2d = pl.pallas_call(
        kernel,
        out_shape=jax.ShapeDtypeStruct((rows, lane), out_dtype),
        grid=(grid,),
        in_specs=[pl.BlockSpec((block_rows, lane), lambda i: (i, 0))],
        out_specs=pl.BlockSpec((block_rows, lane), lambda i: (i, 0)),
        compiler_params=pltpu.CompilerParams(
            dimension_semantics=("parallel",),
            vmem_limit_bytes=int(min(vmem_cap // 2, 64 << 20)),
        ),
        cost_estimate=pl.CostEstimate(
            flops=n if scale else 0,
            transcendentals=0,
            bytes_accessed=n * x.dtype.itemsize + n * out_dtype.itemsize,
        ),
    )(x2d)

    return out2d.reshape(x.shape)


def to_dtype_dict(result: dict, dtype=jnp.float32, scale: bool = True) -> dict:
    """Mirror of ToDType.forward: converts result['inputs'], preserves other keys."""
    result = dict(result)
    result["inputs"] = to_dtype(result["inputs"], dtype=dtype, scale=scale)
    return result


if __name__ == "__main__":
    key = jax.random.PRNGKey(0)

    # Case 1: small video-clip-shaped input (batch, T, C, H, W), uint8 0..255,
    # default ToDType behaviour (float32, /255) through the dict wrapper.
    B, T, C, H, W = 2, 8, 3, 16, 16
    k1, k2 = jax.random.split(key)
    x1 = jax.random.randint(k1, (B, T, C, H, W), 0, 256, dtype=jnp.int32).astype(jnp.uint8)
    out = to_dtype_dict({"inputs": x1, "meta": "preserved"}, dtype=jnp.float32, scale=True)
    y1 = jax.block_until_ready(out["inputs"])
    ref1 = x1.astype(jnp.float32) / 255.0
    assert y1.shape == x1.shape and y1.dtype == jnp.float32 and out["meta"] == "preserved"
    np.testing.assert_allclose(np.asarray(y1), np.asarray(ref1), rtol=1e-6, atol=1e-7)

    # Case 2: shape whose flat size is not a multiple of 512 (uses lane=384)
    # and whose row count does not divide the block -> exercises the masked
    # partial boundary block (no padding anywhere).
    x2 = jax.random.randint(k2, (3, 5, 3, 16, 24), 0, 256, dtype=jnp.int32).astype(jnp.uint8)
    y2 = jax.block_until_ready(to_dtype(x2, dtype=jnp.float32, scale=True))
    ref2 = x2.astype(jnp.float32) / 255.0
    np.testing.assert_allclose(np.asarray(y2), np.asarray(ref2), rtol=1e-6, atol=1e-7)

    # Case 3: bf16 output (halves write traffic for mem-bound preprocessing).
    y3 = jax.block_until_ready(to_dtype(x1, dtype=jnp.bfloat16, scale=True))
    ref3 = (x1.astype(jnp.float32) / 255.0).astype(jnp.bfloat16)
    assert y3.dtype == jnp.bfloat16
    np.testing.assert_array_equal(np.asarray(y3, dtype=np.float32),
                                  np.asarray(ref3, dtype=np.float32))

    # Case 4: scale=False is a pure cast.
    y4 = jax.block_until_ready(to_dtype(x1, dtype=jnp.float32, scale=False))
    np.testing.assert_array_equal(np.asarray(y4), np.asarray(x1.astype(jnp.float32)))

    print("KERNEL_OK")
</pallas_src>

<mosaic_0001>
module attributes {stable_mosaic.version = 11 : i64} {
  func.func @_to_dtype_kernel(%arg0: i32, %arg1: memref<24x512xi8, #tpu.memory_space<vmem>>, %arg2: memref<24x512xf32, #tpu.memory_space<vmem>>) attributes {dimension_semantics = [#tpu.dimension_semantics<parallel>], iteration_bounds = array<i64: 1>, scalar_prefetch = 0 : i64, scratch_operands = 0 : i64, tpu.core_type = #tpu.core_type<tc>, window_params = [{transform_indices = @transform_0, window_bounds = array<i64: 24, 512>}, {transform_indices = @transform_1, window_bounds = array<i64: 24, 512>}]} {
    %c0 = arith.constant 0 : index
    %c0_0 = arith.constant 0 : index
    %0 = vector.load %arg1[%c0, %c0_0] : memref<24x512xi8, #tpu.memory_space<vmem>>, vector<24x512xi8>
    %1 = arith.uitofp %0 : vector<24x512xi8> to vector<24x512xf32>
    %cst = arith.constant 2.550000e+02 : f32
    %2 = vector.broadcast %cst : f32 to vector<24x512xf32>
    %3 = arith.divf %1, %2 : vector<24x512xf32>
    %c0_1 = arith.constant 0 : index
    %c0_2 = arith.constant 0 : index
    %4 = vector.load %arg2[%c0_1, %c0_2] : memref<24x512xf32, #tpu.memory_space<vmem>>, vector<24x512xf32>
    tpu.vector_store %arg2[%c0_1, %c0_2], %3 {strides = array<i32>} : memref<24x512xf32, #tpu.memory_space<vmem>>, vector<24x512xf32>,
    return
  }
  func.func @transform_0(%arg0: i32) -> (i32, i32) {
    %c0_i32 = arith.constant 0 : i32
    %c0_i32_0 = arith.constant 0 : i32
    return %arg0, %c0_i32 : i32, i32
  }
  func.func @transform_1(%arg0: i32) -> (i32, i32) {
    %c0_i32 = arith.constant 0 : i32
    %c0_i32_0 = arith.constant 0 : i32
    return %arg0, %c0_i32 : i32, i32
  }
}

</mosaic_0001>

<llo_original>
// kernel: tpu_custom_call.1
$region0: #{tpu_custom_call.1}
  #allocation0 [shape = 'u32[]', space=smem, size = 0x4, offset = 0x4, fixed_abs, tag = 'smem constant byte address 0x4 - core index']
  #allocation1 [shape = 'u32[144,128]{1,0:T(1,128)}', space=vmem, size = 0x12000, scoped, tag = 'internal scratch']
  %s0 = inlined_call_operand.hbm [shape: u8[24,512], index: 0, kind: input, shape index: {}]
  %s1 = inlined_call_operand.hbm [shape: f32[24,512], index: 1, kind: output, shape index: {}]
  %s2 = sld [smem:[#allocation0]]
  $region18: #{tpu_custom_call.1} parent=0
    _
  %s4 = ssub.s32 1, %s2
  %s5 = scalar_select 0, %s4, %s2
  $region1: #{tpu_custom_call.1} parent=0
    #allocation2 [shape = 'u8[12288]{0}', space=vmem, size = 0x3000, scoped, tag = 'input window, operand 0, single buffered']
    #allocation3 [shape = 's32[1]{0}', space=sflag, size = 0x4, scoped, tag = 'scoped memory for tpu_custom_call.1']
    #allocation4 [shape = 's32[1]{0}', space=sflag, size = 0x4, scoped, tag = 'scoped memory for tpu_custom_call.1']
    #allocation5 [shape = 'u8[49152]{0}', space=vmem, size = 0xc000, scoped, tag = 'output window, operand 0, single buffered']
    %6 = vsyncpa [#allocation3], 0
    %7 = vsyncpa [#allocation4], 0
    // Predicated region
    $region2: #{tpu_custom_call.1} parent=1 // pred_check
      _
    $region3: #{tpu_custom_call.1} parent=1 // pred_check_branch
      %9 = sbr.rel (0) target = $region5
    $region4: #{tpu_custom_call.1} parent=1 // pred_region
      %s11 = ssub.s32 384, 384
      %12 = vsyncadd [#allocation3], %s11
      %s13 = sshll.u32 [#allocation2], 4
      %s14 = int_to_ptr.vmem [resolvable:$true] %s13
      %19 = dma.hbm_to_vmem [thread:$0]  %s0, 384, %s14, [#allocation3], 128, 128, 8
    $region5: #{tpu_custom_call.1} parent=1 // pred_fallthru
      _
    // Predicated region
    $region6: #{tpu_custom_call.1} parent=1 // pred_check
      _
    $region7: #{tpu_custom_call.1} parent=1 // pred_check_branch
      %21 = sbr.rel (0) target = $region9
    $region8: #{tpu_custom_call.1} parent=1 // pred_region
      %22 = dma.done [#allocation3], 384
    $region9: #{tpu_custom_call.1} parent=1 // pred_fallthru
      _
    %v23 = vld [vmem:[#allocation2] sm:$0xff]
    %v24 = vld [vmem:[#allocation2 + $0x8] sm:$0xff]
    %v25 = vld [vmem:[#allocation2 + $0x10] sm:$0xff]
    %v26 = vunpack.c.0.s8 %v23
    %v27 = vunpack.c.1.s8 %v23
    %v28 = vunpack.c.2.s8 %v23
    %v29 = vunpack.c.3.s8 %v23
    %v30 = vunpack.c.0.s8 %v24
    %v31 = vunpack.c.1.s8 %v24
    %v32 = vunpack.c.2.s8 %v24
    %v33 = vunpack.c.3.s8 %v24
    %v34 = vunpack.c.0.s8 %v25
    %v35 = vunpack.c.1.s8 %v25
    %v36 = vunpack.c.2.s8 %v25
    %v37 = vunpack.c.3.s8 %v25
    %v38 = vand.u32 %v26, 255
    %v39 = vand.u32 %v27, 255
    %v40 = vand.u32 %v28, 255
    %v41 = vand.u32 %v29, 255
    %v42 = vand.u32 %v30, 255
    %v43 = vand.u32 %v31, 255
    %v44 = vand.u32 %v32, 255
    %v45 = vand.u32 %v33, 255
    %v46 = vand.u32 %v34, 255
    %v47 = vand.u32 %v35, 255
    %v48 = vand.u32 %v36, 255
    %v49 = vand.u32 %v37, 255
    %v50 = vcvt.s32.f32 %v38
    %v51 = vcvt.s32.f32 %v39
    %v52 = vcvt.s32.f32 %v40
    %v53 = vcvt.s32.f32 %v41
    %v54 = vcvt.s32.f32 %v42
    %v55 = vcvt.s32.f32 %v43
    %v56 = vcvt.s32.f32 %v44
    %v57 = vcvt.s32.f32 %v45
    %v58 = vcvt.s32.f32 %v46
    %v59 = vcvt.s32.f32 %v47
    %v60 = vcvt.s32.f32 %v48
    %v61 = vcvt.s32.f32 %v49
    %v62 = vrcp.pop 255.0
    %v63 = vmul.f32 %v50, %v62
    %v64 = vmul.f32 %v51, %v62
    %v65 = vmul.f32 %v52, %v62
    %v66 = vmul.f32 %v53, %v62
    %v67 = vmul.f32 %v54, %v62
    %v68 = vmul.f32 %v55, %v62
    %v69 = vmul.f32 %v56, %v62
    %v70 = vmul.f32 %v57, %v62
    %v71 = vmul.f32 %v58, %v62
    %v72 = vmul.f32 %v59, %v62
    %v73 = vmul.f32 %v60, %v62
    %v74 = vmul.f32 %v61, %v62
    %75 = vst [vmem:[#allocation5] sm:$0xff] %v63
    %76 = vst [vmem:[#allocation5 + $0x8] sm:$0xff] %v64
    %77 = vst [vmem:[#allocation5 + $0x10] sm:$0xff] %v65
    %78 = vst [vmem:[#allocation5 + $0x18] sm:$0xff] %v66
    %79 = vst [vmem:[#allocation5 + $0x20] sm:$0xff] %v67
    %80 = vst [vmem:[#allocation5 + $0x28] sm:$0xff] %v68
    %81 = vst [vmem:[#allocation5 + $0x30] sm:$0xff] %v69
    %82 = vst [vmem:[#allocation5 + $0x38] sm:$0xff] %v70
    %83 = vst [vmem:[#allocation5 + $0x40] sm:$0xff] %v71
    %84 = vst [vmem:[#allocation5 + $0x48] sm:$0xff] %v72
    %85 = vst [vmem:[#allocation5 + $0x50] sm:$0xff] %v73
    %86 = vst [vmem:[#allocation5 + $0x58] sm:$0xff] %v74
    // Predicated region
    $region10: #{tpu_custom_call.1} parent=1 // pred_check
      _
    $region11: #{tpu_custom_call.1} parent=1 // pred_check_branch
      %88 = sbr.rel (0) target = $region13
    $region12: #{tpu_custom_call.1} parent=1 // pred_region
      %s90 = ssub.s32 1536, 1536
      %91 = vsyncadd [#allocation4], %s90
      %s92 = sshll.u32 [#allocation5], 4
      %s93 = int_to_ptr.vmem [resolvable:$true] %s92
      %98 = dma.vmem_to_hbm [thread:$0]  %s93, 1536, %s1, [#allocation4], 512, 512, 32
    $region13: #{tpu_custom_call.1} parent=1 // pred_fallthru
      _
    // Predicated region
    $region14: #{tpu_custom_call.1} parent=1 // pred_check
      _
    $region15: #{tpu_custom_call.1} parent=1 // pred_check_branch
      %100 = sbr.rel (0) target = $region17
    $region16: #{tpu_custom_call.1} parent=1 // pred_region
      %101 = dma.done [#allocation4], 1536
    $region17: #{tpu_custom_call.1} parent=1 // pred_fallthru
      _
    %102 = vsyncpa [#allocation3], 1
    %103 = vsyncpa [#allocation4], 1

</llo_original>
